<compile_context>
chip_gen: v6e
topology: v6e:2x2x1
jax: 0.10.0
libtpu: 0.0.40
codegen_flags: <defaults>
</compile_context>

<pallas_src>
import functools

import jax
import jax.numpy as jnp
import numpy as np
from jax import lax
from jax.experimental import pallas as pl
from jax.experimental.pallas import tpu as pltpu


def _round_up(x, m):
    return ((x + m - 1) // m) * m


def _reduce_max_kernel(info_ref, out_ref, *, neg_init, l_tail):
    """info_ref: (tb, tl, td) tile. out_ref: (tb, td), VMEM-resident across
    the innermost ("arbitrary") L grid axis."""
    l = pl.program_id(2)

    x = info_ref[...]
    if l_tail:  # static: L % tl != 0 -> mask the ragged last L tile.
        nl = pl.num_programs(2)
        limit = jnp.where(l == nl - 1, l_tail, x.shape[1])
        iota = lax.broadcasted_iota(jnp.int32, x.shape, 1)
        x = jnp.where(iota < limit, x, jnp.asarray(neg_init, x.dtype))

    partial = jnp.max(x, axis=1)

    @pl.when(l == 0)
    def _():  # first L tile: write the partial max directly (no init pass).
        out_ref[...] = partial

    @pl.when(l != 0)
    def _():  # later L tiles: fold into the running max.
        out_ref[...] = jnp.maximum(out_ref[...], partial)


def _choose_tiles(B, L, D, itemsize, *,
                  target_bytes=6 * 1024 * 1024,
                  max_tile_bytes=10 * 1024 * 1024):
    """Pick (tb, tl, td) budgeting the *physical* VMEM footprint of each tile
    (lane dim rounded to 128, sublane dim rounded to the dtype packing)."""
    sub = max(8, 32 // itemsize)      # sublane packing: 8 f32, 16 bf16, 32 int8

    # Split D only when batch alone cannot yield >= 2 parallel blocks
    # (keeps both v7x TensorCores busy).  Halves stay multiples of 128 lanes.
    if B <= sub and D % 256 == 0:
        td = D // 2
    else:
        td = D
    d_phys = _round_up(td, 128)

    def phys(tb_, tl_):
        return tb_ * _round_up(tl_, sub) * d_phys * itemsize

    # Batch tile: full extent for tiny B (legal, dense stores), else a multiple
    # of the sublane packing.
    tb = B if B <= sub else sub

    # Sequence tile: full L unless the tile blows the per-tile cap; halve while
    # keeping tl a multiple of the sublane packing.
    tl = L
    while tl > sub and phys(tb, tl) > max_tile_bytes:
        new_tl = _round_up(max((tl + 1) // 2, sub), sub)
        if new_tl >= tl:
            break
        tl = new_tl

    # Grow the batch tile toward the target while preserving >= 2 batch blocks
    # (megacore / v7x 2-TC sharding) whenever B allows it.
    while (tb * 2 <= B
           and (B + 2 * tb - 1) // (2 * tb) >= 2
           and phys(tb * 2, tl) <= target_bytes):
        tb *= 2

    return tb, tl, td


def _maybe_fold_lanes(info):
    """[B, L, D] -> [B, L//k, k*D] when D < 128 and the fold is a free
    row-major view; restores lane-dense vregs / unmasked stores for small D."""
    B, L, D = info.shape
    if D >= 128 or 128 % D != 0:
        return info, 1
    k = 128 // D
    if k <= 1 or L % k != 0:
        return info, 1
    return info.reshape(B, L // k, k * D), k


def reduce_max(info: jax.Array, leng_mask=None, *, tb=None, tl=None,
               vmem_limit_bytes=32 * 1024 * 1024) -> jax.Array:
    """RecuderMaxLayer.forward: info [B, L, D] -> [B, D] = max over axis -2.
    `leng_mask` is accepted and ignored, exactly like the PyTorch module."""
    del leng_mask  # not used by RecuderMaxLayer.forward (by design)

    B, L0, D0 = info.shape
    orig_dtype = info.dtype
    itemsize = jnp.dtype(orig_dtype).itemsize

    if jnp.issubdtype(orig_dtype, jnp.floating):
        neg_init = float("-inf")
    else:
        neg_init = int(jnp.iinfo(orig_dtype).min)  # 0 for unsigned: still a valid identity

    # Small-D lane folding (free row-major reshape).
    x, k = _maybe_fold_lanes(info)
    _, L, D = x.shape

    a_tb, a_tl, td = _choose_tiles(B, L, D, itemsize)
    tb = a_tb if tb is None else tb
    tl = a_tl if tl is None else min(tl, L)

    nb = pl.cdiv(B, tb)
    nd = D // td
    nl = pl.cdiv(L, tl)
    l_tail = L % tl            # static; 0 -> no in-kernel masking emitted

    out = pl.pallas_call(
        functools.partial(_reduce_max_kernel, neg_init=neg_init, l_tail=l_tail),
        out_shape=jax.ShapeDtypeStruct((B, D), orig_dtype),
        grid_spec=pltpu.PrefetchScalarGridSpec(
            num_scalar_prefetch=0,
            grid=(nb, nd, nl),
            in_specs=[
                pl.BlockSpec((tb, tl, td), lambda b, d, l: (b, l, d)),
            ],
            # Same output block for every l -> VMEM-resident running max.
            out_specs=pl.BlockSpec((tb, td), lambda b, d, l: (b, d)),
        ),
        compiler_params=pltpu.CompilerParams(
            dimension_semantics=("parallel", "parallel", "arbitrary"),
            vmem_limit_bytes=vmem_limit_bytes,
        ),
        cost_estimate=pl.CostEstimate(
            flops=B * L * D,                      # one compare per element
            transcendentals=0,
            bytes_accessed=(B * L * D + B * D) * itemsize,
        ),
    )(x)

    if k > 1:
        # Undo the lane fold: max over the k sequence groups (tiny).
        out = jnp.max(out.reshape(B, k, D0), axis=1)
    return out


if __name__ == "__main__":
    key = jax.random.PRNGKey(0)
    k1, k2, k3, k4, k5 = jax.random.split(key, 5)

    ok = True

    def check(out, info):
        ref = jnp.max(info, axis=-2)
        o = np.asarray(out.astype(jnp.float32))
        r = np.asarray(ref.astype(jnp.float32))
        return out.shape == ref.shape and np.allclose(o, r, rtol=0, atol=0)

    # Case 1: module-interface shapes (small D -> lane-folding path), with a
    # leng_mask argument that is ignored, exactly like the PyTorch module.
    B, L, D = 2, 8, 32
    info1 = jax.random.normal(k1, (B, L, D), dtype=jnp.float32)
    leng_mask = (jax.random.uniform(k2, (B, L)) > 0.5).astype(jnp.float32)
    out1 = jax.block_until_ready(reduce_max(info1, leng_mask))
    ok &= check(out1, info1)

    # Case 2: ragged batch (B % tb != 0) and ragged sequence (L % tl != 0):
    # exercises no-pad partial blocks + in-kernel tail masking + accumulator.
    info2 = jax.random.normal(k3, (10, 50, 128), dtype=jnp.float32)
    out2 = jax.block_until_ready(reduce_max(info2, None, tb=8, tl=16))
    ok &= check(out2, info2)

    # Case 3: tiny batch with D % 256 == 0 -> D split into two 128-lane
    # parallel blocks (v7x 2-TC path).
    info3 = jax.random.normal(k4, (2, 24, 256), dtype=jnp.float32)
    out3 = jax.block_until_ready(reduce_max(info3, None))
    ok &= check(out3, info3)

    # Case 4: bf16 with a ragged L tail (max is exact, so comparison is exact).
    info4 = jax.random.normal(k5, (16, 40, 128), dtype=jnp.float32).astype(jnp.bfloat16)
    out4 = jax.block_until_ready(reduce_max(info4, None, tl=16))
    ok &= check(out4, info4)

    if not ok:
        raise AssertionError("Pallas kernel does not match reference")
    print("KERNEL_OK")
</pallas_src>

<mosaic_0001>
module attributes {stable_mosaic.version = 11 : i64} {
  func.func @_reduce_max_kernel(%arg0: i32, %arg1: i32, %arg2: i32, %arg3: memref<2x2x128xf32, #tpu.memory_space<vmem>>, %arg4: memref<2x128xf32, #tpu.memory_space<vmem>>) attributes {dimension_semantics = [#tpu.dimension_semantics<parallel>, #tpu.dimension_semantics<parallel>, #tpu.dimension_semantics<arbitrary>], iteration_bounds = array<i64: 1, 1, 1>, scalar_prefetch = 0 : i64, scratch_operands = 0 : i64, tpu.core_type = #tpu.core_type<tc>, window_params = [{transform_indices = @transform_0, window_bounds = array<i64: 2, 2, 128>}, {transform_indices = @transform_1, window_bounds = array<i64: 2, 128>}]} {
    %c0 = arith.constant 0 : index
    %c0_0 = arith.constant 0 : index
    %c0_1 = arith.constant 0 : index
    %0 = vector.load %arg3[%c0, %c0_0, %c0_1] : memref<2x2x128xf32, #tpu.memory_space<vmem>>, vector<2x2x128xf32>
    %cst = arith.constant dense<0xFF800000> : vector<2x128xf32>
    %1 = vector.multi_reduction <maximumf>, %0, %cst [1] : vector<2x2x128xf32> to vector<2x128xf32>
    %c0_i32 = arith.constant 0 : i32
    %2 = arith.cmpi eq, %arg2, %c0_i32 : i32
    %3 = arith.extui %2 : i1 to i32
    %c0_i32_2 = arith.constant 0 : i32
    %4 = arith.cmpi ne, %3, %c0_i32_2 : i32
    scf.if %4 {
      %c0_5 = arith.constant 0 : index
      %c0_6 = arith.constant 0 : index
      %8 = vector.load %arg4[%c0_5, %c0_6] : memref<2x128xf32, #tpu.memory_space<vmem>>, vector<2x128xf32>
      tpu.vector_store %arg4[%c0_5, %c0_6], %1 {strides = array<i32>} : memref<2x128xf32, #tpu.memory_space<vmem>>, vector<2x128xf32>,
    } else {
    }
    %c0_i32_3 = arith.constant 0 : i32
    %5 = arith.cmpi ne, %arg2, %c0_i32_3 : i32
    %6 = arith.extui %5 : i1 to i32
    %c0_i32_4 = arith.constant 0 : i32
    %7 = arith.cmpi ne, %6, %c0_i32_4 : i32
    scf.if %7 {
      %c0_5 = arith.constant 0 : index
      %c0_6 = arith.constant 0 : index
      %8 = vector.load %arg4[%c0_5, %c0_6] : memref<2x128xf32, #tpu.memory_space<vmem>>, vector<2x128xf32>
      %9 = arith.maximumf %8, %1 : vector<2x128xf32>
      %c0_7 = arith.constant 0 : index
      %c0_8 = arith.constant 0 : index
      %10 = vector.load %arg4[%c0_7, %c0_8] : memref<2x128xf32, #tpu.memory_space<vmem>>, vector<2x128xf32>
      tpu.vector_store %arg4[%c0_7, %c0_8], %9 {strides = array<i32>} : memref<2x128xf32, #tpu.memory_space<vmem>>, vector<2x128xf32>,
    } else {
    }
    return
  }
  func.func @transform_0(%arg0: i32, %arg1: i32, %arg2: i32) -> (i32, i32, i32) {
    %c0_i32 = arith.constant 0 : i32
    return %arg0, %arg2, %arg1 : i32, i32, i32
  }
  func.func @transform_1(%arg0: i32, %arg1: i32, %arg2: i32) -> (i32, i32) {
    %c0_i32 = arith.constant 0 : i32
    return %arg0, %arg1 : i32, i32
  }
}

</mosaic_0001>

<llo_original>
// kernel: tpu_custom_call.1
$region0: #{tpu_custom_call.1}
  #allocation0 [shape = 'u32[]', space=smem, size = 0x4, offset = 0x4, fixed_abs, tag = 'smem constant byte address 0x4 - core index']
  #allocation1 [shape = 'u32[144,128]{1,0:T(1,128)}', space=vmem, size = 0x12000, scoped, tag = 'internal scratch']
  %s0 = inlined_call_operand.hbm [shape: f32[2,2,128], index: 0, kind: input, shape index: {}]
  %s1 = inlined_call_operand.hbm [shape: f32[2,128], index: 1, kind: output, shape index: {}]
  %s2 = sld [smem:[#allocation0]]
  $region26: #{tpu_custom_call.1} parent=0
    _
  %s4 = ssub.s32 1, %s2
  %s5 = scalar_select 0, %s4, %s2
  $region1: #{tpu_custom_call.1} parent=0
    #allocation2 [shape = 'u8[2048]{0}', space=vmem, size = 0x800, scoped, tag = 'input window, operand 0, single buffered']
    #allocation3 [shape = 's32[1]{0}', space=sflag, size = 0x4, scoped, tag = 'scoped memory for tpu_custom_call.1']
    #allocation4 [shape = 's32[1]{0}', space=sflag, size = 0x4, scoped, tag = 'scoped memory for tpu_custom_call.1']
    #allocation5 [shape = 'u8[1024]{0}', space=vmem, size = 0x400, scoped, tag = 'output window, operand 0, single buffered']
    %6 = vsyncpa [#allocation3], 0
    %7 = vsyncpa [#allocation4], 0
    // Predicated region
    $region2: #{tpu_custom_call.1} parent=1 // pred_check
      _
    $region3: #{tpu_custom_call.1} parent=1 // pred_check_branch
      %9 = sbr.rel (0) target = $region5
    $region4: #{tpu_custom_call.1} parent=1 // pred_region
      %s11 = ssub.s32 64, 64
      %12 = vsyncadd [#allocation3], %s11
      %s13 = sshll.u32 [#allocation2], 4
      %s14 = int_to_ptr.vmem [resolvable:$true] %s13
      %19 = dma.hbm_to_vmem [thread:$0]  %s0, 64, %s14, [#allocation3], 32, 32, 2
    $region5: #{tpu_custom_call.1} parent=1 // pred_fallthru
      _
    // Predicated region
    $region6: #{tpu_custom_call.1} parent=1 // pred_check
      _
    $region7: #{tpu_custom_call.1} parent=1 // pred_check_branch
      %21 = sbr.rel (0) target = $region9
    $region8: #{tpu_custom_call.1} parent=1 // pred_region
      %22 = dma.done [#allocation3], 64
    $region9: #{tpu_custom_call.1} parent=1 // pred_fallthru
      _
    %v23 = vld [vmem:[#allocation2] sm:$0x3]
    %v24 = vld [vmem:[#allocation2 + $0x2] sm:$0x3]
    %vm25 = vcmask 1041408
    %v26 = vsel %vm25, %v23, -inf
    %v27 = vrot.slane %v26, 4
    %v28 = vmax.f32 %v26, %v27
    %v29 = vrot.slane %v28, 2
    %v30 = vmax.f32 %v28, %v29
    %v31 = vrot.slane %v30, 1
    %v32 = vmax.f32 %v30, %v31
    %v33 = vsel %vm25, %v24, -inf
    %v34 = vrot.slane %v33, 4
    %v35 = vmax.f32 %v33, %v34
    %v36 = vrot.slane %v35, 2
    %v37 = vmax.f32 %v35, %v36
    %v38 = vrot.slane %v37, 1
    %v39 = vmax.f32 %v37, %v38
    %p40 = scmp.eq.s32.totalorder 0, 0
    // Predicated region
    $region10: #{tpu_custom_call.1} parent=1 // pred_check
      %p41 = pneg %p40
    $region11: #{tpu_custom_call.1} parent=1 // pred_check_branch
      %43 = sbr.rel (%p41) target = $region13
    $region12: #{tpu_custom_call.1} parent=1 // pred_region
      %vm46 = vcmask 1041409
      %v47 = vsel %vm46, %v39, %v32
      %49 = vst [vmem:[#allocation5] sm:$0x3] %v47
    $region13: #{tpu_custom_call.1} parent=1 // pred_fallthru
      _
    %p50 = scmp.ne.s32.totalorder 0, 0
    // Predicated region
    $region14: #{tpu_custom_call.1} parent=1 // pred_check
      %p51 = pneg %p50
    $region15: #{tpu_custom_call.1} parent=1 // pred_check_branch
      %53 = sbr.rel (%p51) target = $region17
    $region16: #{tpu_custom_call.1} parent=1 // pred_region
      %v54 = vld [vmem:[#allocation5] sm:$0x3]
      %vm57 = vcmask 1041409
      %v58 = vsel %vm57, %v39, %v32
      %v60 = vmax.f32 %v54, %v58
      %61 = vst [vmem:[#allocation5] sm:$0x3] %v60
    $region17: #{tpu_custom_call.1} parent=1 // pred_fallthru
      _
    // Predicated region
    $region18: #{tpu_custom_call.1} parent=1 // pred_check
      _
    $region19: #{tpu_custom_call.1} parent=1 // pred_check_branch
      %63 = sbr.rel (0) target = $region21
    $region20: #{tpu_custom_call.1} parent=1 // pred_region
      %s65 = ssub.s32 32, 32
      %66 = vsyncadd [#allocation4], %s65
      %s68 = sshll.u32 [#allocation5], 4
      %s69 = int_to_ptr.vmem [resolvable:$true] %s68
      %71 = dma.vmem_to_hbm [thread:$0]  %s69, 32, %s1, [#allocation4]
    $region21: #{tpu_custom_call.1} parent=1 // pred_fallthru
      _
    // Predicated region
    $region22: #{tpu_custom_call.1} parent=1 // pred_check
      _
    $region23: #{tpu_custom_call.1} parent=1 // pred_check_branch
      %73 = sbr.rel (0) target = $region25
    $region24: #{tpu_custom_call.1} parent=1 // pred_region
      %74 = dma.done [#allocation4], 32
    $region25: #{tpu_custom_call.1} parent=1 // pred_fallthru
      _
    %75 = vsyncpa [#allocation3], 1
    %76 = vsyncpa [#allocation4], 1

</llo_original>
